<compile_context>
chip_gen: v7x
topology: tpu7x:2x2x1
jax: 0.10.0
libtpu: 0.0.40
codegen_flags: <defaults>
</compile_context>

<pallas_src>
import functools

import jax
import jax.numpy as jnp
from jax.experimental import pallas as pl
from jax.experimental.pallas import tpu as pltpu


_VMEM_LIMIT = 48 * 1024 * 1024  # conservative across v5e/v6e (128 MiB) and v7x (64 MiB)


def _choose_tile_m(rows, d_in, d_fus, in_bytes, out_bytes, weight_bytes,
                   vmem_budget=_VMEM_LIMIT):
    """Pick the row-tile size from a VMEM budget."""
    if rows <= 8:
        return rows  # block == full dim, always legal
    # Bytes per row of streamed, double-buffered blocks + f32 epilogue temps.
    per_row = (2 * in_bytes * (d_in + d_fus)   # x, f input blocks (x2 buffers)
               + 2 * out_bytes * d_in          # output block (x2 buffers)
               + 24 * d_in)                    # rg / r / g f32 temporaries
    avail = int(0.65 * vmem_budget) - 2 * weight_bytes
    tm = max(avail // per_row, 16) if avail > 0 else 16
    tm = int(min(tm, 2048, rows))
    if rows >= 32:
        # Keep >= 2 grid steps so the "parallel" axis can shard across 2 TCs.
        half = -(-rows // 2)
        tm = min(tm, ((half + 15) // 16) * 16)
    tm = max((tm // 16) * 16, 8)
    return tm


def sfu_kernel(x_ref, f_ref, wx_ref, wf_ref, b_ref, o_ref, *, d_in,
               compute_dtype):
    """One row-tile of the SFU forward pass.

    x_ref:  (TM, D_in)        input rows (original dtype, e.g. f32)
    f_ref:  (TM, D_fus)       fusion rows
    wx_ref: (D_in, 2*D_in)    bf16 [W_r | W_g] rows that multiply x
    wf_ref: (D_fus, 2*D_in)   bf16 [W_r | W_g] rows that multiply fusions
    b_ref:  (1, 2*D_in)       f32 [b_r | b_g]
    o_ref:  (TM, D_in)        output rows
    """
    x = x_ref[...]
    f = f_ref[...]

    # cat([x, f], -1) @ W  ==  x @ W[:D_in] + f @ W[D_in:]  (concat folded away)
    rg = jnp.dot(x.astype(compute_dtype), wx_ref[...],
                 preferred_element_type=jnp.float32)
    rg = rg + jnp.dot(f.astype(compute_dtype), wf_ref[...],
                      preferred_element_type=jnp.float32)
    rg = rg + b_ref[...]

    r = jnp.tanh(rg[:, :d_in])
    # sigmoid(z) == 0.5 * (1 + tanh(0.5 * z)) -> single EUP push per element.
    g = 0.5 * (1.0 + jnp.tanh(0.5 * rg[:, d_in:]))

    xf = x.astype(jnp.float32)
    # g*r + (1-g)*x == g*(r - x) + x   (residual path keeps full-precision x)
    o_ref[...] = (g * (r - xf) + xf).astype(o_ref.dtype)


def pack_sfu_params(w_r, b_r, w_g, b_g, compute_dtype=jnp.bfloat16):
    """Pack SFU parameters ONCE (hoist out of the per-call path).

    w_r, w_g: (D_in + D_fus, D_in)  (i.e. torch nn.Linear weight .T)
    b_r, b_g: (D_in,)
    Returns (wx, wf, b) with r/g fused along N and the concat K-split applied.
    """
    d_in = w_r.shape[1]
    wx = jnp.concatenate([w_r[:d_in], w_g[:d_in]], axis=1).astype(compute_dtype)
    wf = jnp.concatenate([w_r[d_in:], w_g[d_in:]], axis=1).astype(compute_dtype)
    b = jnp.concatenate([b_r, b_g]).reshape(1, 2 * d_in).astype(jnp.float32)
    return wx, wf, b


def sfu_forward(x, fusions, wx, wf, b, *, compute_dtype=jnp.bfloat16,
                out_dtype=None, row_tile=None):
    """x: (B, S, D_in), fusions: (B, S, D_fus); (wx, wf, b) from pack_sfu_params.

    Returns (B, S, D_in) in out_dtype (defaults to x.dtype).
    """
    B, S, d_in = x.shape
    d_fus = fusions.shape[-1]
    rows = B * S
    out_dtype = x.dtype if out_dtype is None else out_dtype

    # Pure views — no extra HBM traffic for activations.
    x2 = x.reshape(rows, d_in)
    f2 = fusions.reshape(rows, d_fus)

    in_b = jnp.dtype(x.dtype).itemsize
    out_b = jnp.dtype(out_dtype).itemsize
    w_bytes = (wx.size * jnp.dtype(wx.dtype).itemsize
               + wf.size * jnp.dtype(wf.dtype).itemsize
               + b.size * 4)
    tile_m = row_tile if row_tile is not None else _choose_tile_m(
        rows, d_in, d_fus, in_b, out_b, w_bytes)

    grid = (pl.cdiv(rows, tile_m),)

    kernel = functools.partial(sfu_kernel, d_in=d_in,
                               compute_dtype=compute_dtype)

    out = pl.pallas_call(
        kernel,
        out_shape=jax.ShapeDtypeStruct((rows, d_in), out_dtype),
        grid_spec=pltpu.PrefetchScalarGridSpec(
            num_scalar_prefetch=0,
            grid=grid,
            in_specs=[
                pl.BlockSpec((tile_m, d_in), lambda i: (i, 0)),        # x rows
                pl.BlockSpec((tile_m, d_fus), lambda i: (i, 0)),       # fusion rows
                pl.BlockSpec((d_in, 2 * d_in), lambda i: (0, 0)),      # Wx (resident)
                pl.BlockSpec((d_fus, 2 * d_in), lambda i: (0, 0)),     # Wf (resident)
                pl.BlockSpec((1, 2 * d_in), lambda i: (0, 0)),         # bias
            ],
            out_specs=pl.BlockSpec((tile_m, d_in), lambda i: (i, 0)),
        ),
        compiler_params=pltpu.CompilerParams(
            dimension_semantics=("parallel",),
            vmem_limit_bytes=_VMEM_LIMIT,
        ),
    )(x2, f2, wx, wf, b)

    return out.reshape(B, S, d_in)


def reference_sfu(x, fusions, w_r, b_r, w_g, b_g):
    rf = jnp.concatenate([x, fusions], axis=2)
    r = jnp.tanh(rf @ w_r + b_r)
    g = jax.nn.sigmoid(rf @ w_g + b_g)
    return g * r + (1.0 - g) * x


def _run_case(key, B, S, d_in, d_fus):
    ks = jax.random.split(key, 6)
    x = jax.random.normal(ks[0], (B, S, d_in), jnp.float32)
    fus = jax.random.normal(ks[1], (B, S, d_fus), jnp.float32)

    d_cat = d_in + d_fus
    bound = 1.0 / float(d_cat) ** 0.5
    w_r = jax.random.uniform(ks[2], (d_cat, d_in), jnp.float32, -bound, bound)
    b_r = jax.random.uniform(ks[3], (d_in,), jnp.float32, -bound, bound)
    w_g = jax.random.uniform(ks[4], (d_cat, d_in), jnp.float32, -bound, bound)
    b_g = jax.random.uniform(ks[5], (d_in,), jnp.float32, -bound, bound)

    # Weight packing hoisted out of the per-call path (done once).
    wx, wf, b = pack_sfu_params(w_r, b_r, w_g, b_g)

    out = jax.block_until_ready(jax.jit(sfu_forward)(x, fus, wx, wf, b))
    ref = reference_sfu(x, fus, w_r, b_r, w_g, b_g)

    assert out.shape == (B, S, d_in)
    # bf16 MXU inputs with f32 accumulation + f32 residual path.
    assert jnp.allclose(out, ref, atol=2e-2, rtol=2e-2), (
        f"mismatch (B={B},S={S},D_in={d_in},D_fus={d_fus}): "
        f"max abs diff = {jnp.max(jnp.abs(out - ref)):.3e}")


if __name__ == "__main__":
    key = jax.random.PRNGKey(0)
    k1, k2 = jax.random.split(key)

    # Case 1: lane-aligned feature dims (fast path, fully lane-dense blocks).
    _run_case(k1, B=2, S=8, d_in=128, d_fus=128)

    # Case 2: unaligned feature dims + ragged row grid (masked boundary block).
    _run_case(k2, B=3, S=7, d_in=32, d_fus=96)

    print("KERNEL_OK")
</pallas_src>

<mosaic_0001>
module attributes {stable_mosaic.version = 11 : i64} {
  func.func @sfu_kernel(%arg0: i32, %arg1: memref<16x128xf32, #tpu.memory_space<vmem>>, %arg2: memref<16x128xf32, #tpu.memory_space<vmem>>, %arg3: memref<128x256xbf16, #tpu.memory_space<vmem>>, %arg4: memref<128x256xbf16, #tpu.memory_space<vmem>>, %arg5: memref<1x256xf32, #tpu.memory_space<vmem>>, %arg6: memref<16x128xf32, #tpu.memory_space<vmem>>) attributes {dimension_semantics = [#tpu.dimension_semantics<parallel>], iteration_bounds = array<i64: 1>, scalar_prefetch = 0 : i64, scratch_operands = 0 : i64, tpu.core_type = #tpu.core_type<tc>, window_params = [{transform_indices = @transform_0, window_bounds = array<i64: 16, 128>}, {transform_indices = @transform_1, window_bounds = array<i64: 16, 128>}, {pipeline_mode = #tpu.pipeline_mode<synchronous>, transform_indices = @transform_2, window_bounds = array<i64: 128, 256>}, {pipeline_mode = #tpu.pipeline_mode<synchronous>, transform_indices = @transform_3, window_bounds = array<i64: 128, 256>}, {pipeline_mode = #tpu.pipeline_mode<synchronous>, transform_indices = @transform_4, window_bounds = array<i64: 1, 256>}, {transform_indices = @transform_5, window_bounds = array<i64: 16, 128>}]} {
    %c0 = arith.constant 0 : index
    %c0_0 = arith.constant 0 : index
    %0 = vector.load %arg1[%c0, %c0_0] : memref<16x128xf32, #tpu.memory_space<vmem>>, vector<16x128xf32>
    %c0_1 = arith.constant 0 : index
    %c0_2 = arith.constant 0 : index
    %1 = vector.load %arg2[%c0_1, %c0_2] : memref<16x128xf32, #tpu.memory_space<vmem>>, vector<16x128xf32>
    %2 = arith.truncf %0 : vector<16x128xf32> to vector<16x128xbf16>
    %c0_3 = arith.constant 0 : index
    %c0_4 = arith.constant 0 : index
    %3 = vector.load %arg3[%c0_3, %c0_4] : memref<128x256xbf16, #tpu.memory_space<vmem>>, vector<128x256xbf16>
    %cst = arith.constant dense<0.000000e+00> : vector<16x256xf32>
    %4 = tpu.matmul %2, %3, %cst {dimension_numbers = #tpu.dot_dimension_numbers<[1], [0], [0], [1], [0, 0, 1, 1], [], []>} : vector<16x128xbf16>, vector<128x256xbf16>, vector<16x256xf32> -> vector<16x256xf32>
    %5 = arith.truncf %1 : vector<16x128xf32> to vector<16x128xbf16>
    %c0_5 = arith.constant 0 : index
    %c0_6 = arith.constant 0 : index
    %6 = vector.load %arg4[%c0_5, %c0_6] : memref<128x256xbf16, #tpu.memory_space<vmem>>, vector<128x256xbf16>
    %cst_7 = arith.constant dense<0.000000e+00> : vector<16x256xf32>
    %7 = tpu.matmul %5, %6, %cst_7 {dimension_numbers = #tpu.dot_dimension_numbers<[1], [0], [0], [1], [0, 0, 1, 1], [], []>} : vector<16x128xbf16>, vector<128x256xbf16>, vector<16x256xf32> -> vector<16x256xf32>
    %8 = arith.addf %4, %7 : vector<16x256xf32>
    %c0_8 = arith.constant 0 : index
    %c0_9 = arith.constant 0 : index
    %9 = vector.load %arg5[%c0_8, %c0_9] : memref<1x256xf32, #tpu.memory_space<vmem>>, vector<1x256xf32>
    %10 = vector.broadcast %9 : vector<1x256xf32> to vector<16x256xf32>
    %11 = arith.addf %8, %10 : vector<16x256xf32>
    %12 = vector.extract_strided_slice %11 {offsets = [0, 0], sizes = [16, 128], strides = [1, 1]} : vector<16x256xf32> to vector<16x128xf32>
    %13 = math.tanh %12 : vector<16x128xf32>
    %14 = vector.extract_strided_slice %11 {offsets = [0, 128], sizes = [16, 128], strides = [1, 1]} : vector<16x256xf32> to vector<16x128xf32>
    %cst_10 = arith.constant 5.000000e-01 : f32
    %15 = vector.broadcast %cst_10 : f32 to vector<16x128xf32>
    %16 = arith.mulf %15, %14 : vector<16x128xf32>
    %17 = math.tanh %16 : vector<16x128xf32>
    %cst_11 = arith.constant 1.000000e+00 : f32
    %18 = vector.broadcast %cst_11 : f32 to vector<16x128xf32>
    %19 = arith.addf %18, %17 : vector<16x128xf32>
    %cst_12 = arith.constant 5.000000e-01 : f32
    %20 = vector.broadcast %cst_12 : f32 to vector<16x128xf32>
    %21 = arith.mulf %20, %19 : vector<16x128xf32>
    %22 = arith.subf %13, %0 : vector<16x128xf32>
    %23 = arith.mulf %21, %22 : vector<16x128xf32>
    %24 = arith.addf %23, %0 : vector<16x128xf32>
    %c0_13 = arith.constant 0 : index
    %c0_14 = arith.constant 0 : index
    %25 = vector.load %arg6[%c0_13, %c0_14] : memref<16x128xf32, #tpu.memory_space<vmem>>, vector<16x128xf32>
    tpu.vector_store %arg6[%c0_13, %c0_14], %24 {strides = array<i32>} : memref<16x128xf32, #tpu.memory_space<vmem>>, vector<16x128xf32>,
    return
  }
  func.func @transform_0(%arg0: i32) -> (i32, i32) {
    %c0_i32 = arith.constant 0 : i32
    %c0_i32_0 = arith.constant 0 : i32
    return %arg0, %c0_i32 : i32, i32
  }
  func.func @transform_1(%arg0: i32) -> (i32, i32) {
    %c0_i32 = arith.constant 0 : i32
    %c0_i32_0 = arith.constant 0 : i32
    return %arg0, %c0_i32 : i32, i32
  }
  func.func @transform_2(%arg0: i32) -> (i32, i32) {
    %c0_i32 = arith.constant 0 : i32
    %c0_i32_0 = arith.constant 0 : i32
    %c0_i32_1 = arith.constant 0 : i32
    return %c0_i32, %c0_i32_0 : i32, i32
  }
  func.func @transform_3(%arg0: i32) -> (i32, i32) {
    %c0_i32 = arith.constant 0 : i32
    %c0_i32_0 = arith.constant 0 : i32
    %c0_i32_1 = arith.constant 0 : i32
    return %c0_i32, %c0_i32_0 : i32, i32
  }
  func.func @transform_4(%arg0: i32) -> (i32, i32) {
    %c0_i32 = arith.constant 0 : i32
    %c0_i32_0 = arith.constant 0 : i32
    %c0_i32_1 = arith.constant 0 : i32
    return %c0_i32, %c0_i32_0 : i32, i32
  }
  func.func @transform_5(%arg0: i32) -> (i32, i32) {
    %c0_i32 = arith.constant 0 : i32
    %c0_i32_0 = arith.constant 0 : i32
    return %arg0, %c0_i32 : i32, i32
  }
}

</mosaic_0001>

<llo_original>
// kernel: sfu_forward.1
$region0: #{sfu_forward.1}
  #allocation0 [shape = 'u32[]', space=smem, size = 0x4, offset = 0x4, fixed_abs, tag = 'smem constant byte address 0x4 - core index']
  #allocation1 [shape = 'u32[144,128]{1,0:T(1,128)}', space=vmem, size = 0x12000, scoped, tag = 'internal scratch']
  %s0 = inlined_call_operand.hbm [shape: f32[16,128], index: 0, kind: input, shape index: {}]
  %s1 = inlined_call_operand.hbm [shape: f32[16,128], index: 1, kind: input, shape index: {}]
  %s2 = inlined_call_operand.hbm [shape: bf16[128,256], index: 2, kind: input, shape index: {}]
  %s3 = inlined_call_operand.hbm [shape: bf16[128,256], index: 3, kind: input, shape index: {}]
  %s4 = inlined_call_operand.vmem [shape: f32[1,256], index: 4, kind: input, shape index: {}]
  %s5 = inlined_call_operand.hbm [shape: f32[16,128], index: 5, kind: output, shape index: {}]
  %s6 = sld [smem:[#allocation0]]
  $region46: #{sfu_forward.1} parent=0
    _
  %s8 = ssub.s32 1, %s6
  %s9 = scalar_select 0, %s8, %s6
  $region1: #{sfu_forward.1} parent=0
    #allocation2 [shape = 'u8[8192]{0}', space=vmem, size = 0x2000, scoped, tag = 'input window, operand 0, single buffered']
    #allocation3 [shape = 's32[1]{0}', space=sflag, size = 0x4, scoped, tag = 'scoped memory for sfu_forward.1']
    #allocation4 [shape = 's32[1]{0}', space=sflag, size = 0x4, scoped, tag = 'scoped memory for sfu_forward.1']
    #allocation5 [shape = 'u8[8192]{0}', space=vmem, size = 0x2000, scoped, tag = 'input window, operand 1, single buffered']
    #allocation6 [shape = 's32[1]{0}', space=sflag, size = 0x4, scoped, tag = 'scoped memory for sfu_forward.1']
    #allocation7 [shape = 'u8[65536]{0}', space=vmem, size = 0x10000, scoped, tag = 'input window, operand 2, single buffered']
    #allocation8 [shape = 'u8[65536]{0}', space=vmem, size = 0x10000, scoped, tag = 'input window, operand 3, single buffered']
    #allocation9 [shape = 's32[1]{0}', space=sflag, size = 0x4, scoped, tag = 'scoped memory for sfu_forward.1']
    #allocation10 [shape = 'u8[8192]{0}', space=vmem, size = 0x2000, scoped, tag = 'output window, operand 0, single buffered']
    %10 = vsyncpa [#allocation3], 0
    %11 = vsyncpa [#allocation6], 0
    %12 = vsyncpa [#allocation9], 0
    %13 = vsyncpa [#allocation4], 0
    // Predicated region
    $region2: #{sfu_forward.1} parent=1 // pred_check
      _
    $region3: #{sfu_forward.1} parent=1 // pred_check_branch
      %15 = sbr.rel (0) target = $region5
    $region4: #{sfu_forward.1} parent=1 // pred_region
      %s17 = ssub.s32 256, 256
      %18 = vsyncadd [#allocation3], %s17
      %s19 = sshll.u32 [#allocation2], 4
      %s20 = int_to_ptr.vmem [resolvable:$true] %s19
      %25 = dma.hbm_to_vmem [thread:$0]  %s0, 256, %s20, [#allocation3], 128, 128, 8
    $region5: #{sfu_forward.1} parent=1 // pred_fallthru
      _
    // Predicated region
    $region6: #{sfu_forward.1} parent=1 // pred_check
      _
    $region7: #{sfu_forward.1} parent=1 // pred_check_branch
      %27 = sbr.rel (0) target = $region9
    $region8: #{sfu_forward.1} parent=1 // pred_region
      %s29 = ssub.s32 256, 256
      %30 = vsyncadd [#allocation6], %s29
      %s31 = sshll.u32 [#allocation5], 4
      %s32 = int_to_ptr.vmem [resolvable:$true] %s31
      %37 = dma.hbm_to_vmem [thread:$0]  %s1, 256, %s32, [#allocation6], 128, 128, 8
    $region9: #{sfu_forward.1} parent=1 // pred_fallthru
      _
    // Predicated region
    $region10: #{sfu_forward.1} parent=1 // pred_check
      _
    $region11: #{sfu_forward.1} parent=1 // pred_check_branch
      %39 = sbr.rel (0) target = $region13
    $region12: #{sfu_forward.1} parent=1 // pred_region
      %s41 = ssub.s32 2048, 2048
      %42 = vsyncadd [#allocation6], %s41
      %s43 = sshll.u32 [#allocation7], 4
      %s44 = int_to_ptr.vmem [resolvable:$true] %s43
      %49 = dma.hbm_to_vmem [thread:$0]  %s2, 2048, %s44, [#allocation6], 128, 128, 8
    $region13: #{sfu_forward.1} parent=1 // pred_fallthru
      _
    // Predicated region
    $region14: #{sfu_forward.1} parent=1 // pred_check
      _
    $region15: #{sfu_forward.1} parent=1 // pred_check_branch
      %51 = sbr.rel (0) target = $region17
    $region16: #{sfu_forward.1} parent=1 // pred_region
      %s53 = ssub.s32 2048, 2048
      %54 = vsyncadd [#allocation9], %s53
      %s55 = sshll.u32 [#allocation8], 4
      %s56 = int_to_ptr.vmem [resolvable:$true] %s55
      %61 = dma.hbm_to_vmem [thread:$0]  %s3, 2048, %s56, [#allocation9], 128, 128, 8
    $region17: #{sfu_forward.1} parent=1 // pred_fallthru
      _
    // Predicated region
    $region18: #{sfu_forward.1} parent=1 // pred_check
      _
    $region19: #{sfu_forward.1} parent=1 // pred_check_branch
      %63 = sbr.rel (0) target = $region21
    $region20: #{sfu_forward.1} parent=1 // pred_region
      _
    $region21: #{sfu_forward.1} parent=1 // pred_fallthru
      _
    // Predicated region
    $region22: #{sfu_forward.1} parent=1 // pred_check
      _
    $region23: #{sfu_forward.1} parent=1 // pred_check_branch
      %65 = sbr.rel (0) target = $region25
    $region24: #{sfu_forward.1} parent=1 // pred_region
      %66 = dma.done [#allocation3], 256
    $region25: #{sfu_forward.1} parent=1 // pred_fallthru
      _
    // Predicated region
    $region26: #{sfu_forward.1} parent=1 // pred_check
      _
    $region27: #{sfu_forward.1} parent=1 // pred_check_branch
      %68 = sbr.rel (0) target = $region29
    $region28: #{sfu_forward.1} parent=1 // pred_region
      %69 = dma.done [#allocation6], 256
    $region29: #{sfu_forward.1} parent=1 // pred_fallthru
      _
    // Predicated region
    $region30: #{sfu_forward.1} parent=1 // pred_check
      _
    $region31: #{sfu_forward.1} parent=1 // pred_check_branch
      %71 = sbr.rel (0) target = $region33
    $region32: #{sfu_forward.1} parent=1 // pred_region
      %72 = dma.done [#allocation6], 2048
    $region33: #{sfu_forward.1} parent=1 // pred_fallthru
      _
    // Predicated region
    $region34: #{sfu_forward.1} parent=1 // pred_check
      _
    $region35: #{sfu_forward.1} parent=1 // pred_check_branch
      %74 = sbr.rel (0) target = $region37
    $region36: #{sfu_forward.1} parent=1 // pred_region
      %75 = dma.done [#allocation9], 2048
    $region37: #{sfu_forward.1} parent=1 // pred_fallthru
      _
    %v77 = vld [vmem:[#allocation2] sm:$0xff]
    %v78 = vld [vmem:[#allocation2 + $0x8] sm:$0xff]
    %v79 = vld [vmem:[#allocation5] sm:$0xff]
    %v80 = vld [vmem:[#allocation5 + $0x8] sm:$0xff]
    %v81 = vpack.c.bf16 %v78, %v77
    %v82 = vld [vmem:[#allocation7] sm:$0xff]
    %v83 = vld [vmem:[#allocation7 + $0x8] sm:$0xff]
    %v84 = vld [vmem:[#allocation7 + $0x10] sm:$0xff]
    %v85 = vld [vmem:[#allocation7 + $0x18] sm:$0xff]
    %v86 = vld [vmem:[#allocation7 + $0x20] sm:$0xff]
    %v87 = vld [vmem:[#allocation7 + $0x28] sm:$0xff]
    %v88 = vld [vmem:[#allocation7 + $0x30] sm:$0xff]
    %v89 = vld [vmem:[#allocation7 + $0x38] sm:$0xff]
    %v90 = vld [vmem:[#allocation7 + $0x40] sm:$0xff]
    %v91 = vld [vmem:[#allocation7 + $0x48] sm:$0xff]
    %v92 = vld [vmem:[#allocation7 + $0x50] sm:$0xff]
    %v93 = vld [vmem:[#allocation7 + $0x58] sm:$0xff]
    %v94 = vld [vmem:[#allocation7 + $0x60] sm:$0xff]
    %v95 = vld [vmem:[#allocation7 + $0x68] sm:$0xff]
    %v96 = vld [vmem:[#allocation7 + $0x70] sm:$0xff]
    %v97 = vld [vmem:[#allocation7 + $0x78] sm:$0xff]
    %v98 = vpack.c.bf16 %v80, %v79
    %v99 = vld [vmem:[#allocation8] sm:$0xff]
    %v100 = vld [vmem:[#allocation8 + $0x8] sm:$0xff]
    %v101 = vld [vmem:[#allocation8 + $0x10] sm:$0xff]
    %v102 = vld [vmem:[#allocation8 + $0x18] sm:$0xff]
    %v103 = vld [vmem:[#allocation8 + $0x20] sm:$0xff]
    %v104 = vld [vmem:[#allocation8 + $0x28] sm:$0xff]
    %v105 = vld [vmem:[#allocation8 + $0x30] sm:$0xff]
    %v106 = vld [vmem:[#allocation8 + $0x38] sm:$0xff]
    %v107 = vld [vmem:[#allocation8 + $0x40] sm:$0xff]
    %v108 = vld [vmem:[#allocation8 + $0x48] sm:$0xff]
    %v109 = vld [vmem:[#allocation8 + $0x50] sm:$0xff]
    %v110 = vld [vmem:[#allocation8 + $0x58] sm:$0xff]
    %v111 = vld [vmem:[#allocation8 + $0x60] sm:$0xff]
    %v112 = vld [vmem:[#allocation8 + $0x68] sm:$0xff]
    %v113 = vld [vmem:[#allocation8 + $0x70] sm:$0xff]
    %v114 = vld [vmem:[#allocation8 + $0x78] sm:$0xff]
    %v131 = vunpack.c.l.b16 %v99
    %v132 = vunpack.c.h.b16 %v99
    %v133 = vunpack.c.l.b16 %v100
    %v134 = vunpack.c.h.b16 %v100
    %v135 = vunpack.c.l.b16 %v101
    %v136 = vunpack.c.h.b16 %v101
    %v137 = vunpack.c.l.b16 %v102
    %v138 = vunpack.c.h.b16 %v102
    %v139 = vunpack.c.l.b16 %v103
    %v140 = vunpack.c.h.b16 %v103
    %v141 = vunpack.c.l.b16 %v104
    %v142 = vunpack.c.h.b16 %v104
    %v143 = vunpack.c.l.b16 %v105
    %v144 = vunpack.c.h.b16 %v105
    %v145 = vunpack.c.l.b16 %v106
    %v146 = vunpack.c.h.b16 %v106
    %v147 = vunpack.c.l.b16 %v107
    %v148 = vunpack.c.h.b16 %v107
    %v149 = vunpack.c.l.b16 %v108
    %v150 = vunpack.c.h.b16 %v108
    %v151 = vunpack.c.l.b16 %v109
    %v152 = vunpack.c.h.b16 %v109
    %v153 = vunpack.c.l.b16 %v110
    %v154 = vunpack.c.h.b16 %v110
    %v155 = vunpack.c.l.b16 %v111
    %v156 = vunpack.c.h.b16 %v111
    %v157 = vunpack.c.l.b16 %v112
    %v158 = vunpack.c.h.b16 %v112
    %v159 = vunpack.c.l.b16 %v113
    %v160 = vunpack.c.h.b16 %v113
    %v161 = vunpack.c.l.b16 %v114
    %v162 = vunpack.c.h.b16 %v114
    %v163 = vpack.c.b16 %v133, %v131
    %v164 = vpack.c.b16 %v134, %v132
    %v165 = vpack.c.b16 %v137, %v135
    %v166 = vpack.c.b16 %v138, %v136
    %v167 = vpack.c.b16 %v141, %v139
    %v168 = vpack.c.b16 %v142, %v140
    %v169 = vpack.c.b16 %v145, %v143
    %v170 = vpack.c.b16 %v146, %v144
    %v171 = vpack.c.b16 %v149, %v147
    %v172 = vpack.c.b16 %v150, %v148
    %v173 = vpack.c.b16 %v153, %v151
    %v174 = vpack.c.b16 %v154, %v152
    %v175 = vpack.c.b16 %v157, %v155
    %v176 = vpack.c.b16 %v158, %v156
    %v177 = vpack.c.b16 %v161, %v159
    %v178 = vpack.c.b16 %v162, %v160
    %195 = vmatprep.subr.bf16.mxu0 %v164
    %196 = vmatpush1.bf16.msra.mxu0 %v163
    %197 = vmatprep.subr.bf16.mxu0 %v166
    %198 = vmatpush1.bf16.msra.mxu0 %v165
    %199 = vmatprep.subr.bf16.mxu0 %v168
    %200 = vmatpush1.bf16.msra.mxu0 %v167
    %201 = vmatprep.subr.bf16.mxu0 %v170
    %202 = vmatpush1.bf16.msra.mxu0 %v169
    %203 = vmatprep.subr.bf16.mxu0 %v172
    %204 = vmatpush1.bf16.msra.mxu0 %v171
    %205 = vmatprep.subr.bf16.mxu0 %v174
    %206 = vmatpush1.bf16.msra.mxu0 %v173
    %207 = vmatprep.subr.bf16.mxu0 %v176
    %208 = vmatpush1.bf16.msra.mxu0 %v175
    %209 = vmatprep.subr.bf16.mxu0 %v178
    %210 = vmatpush1.bf16.msra.mxu0 %v177
    %211 = vmatprep.subr.bf16.mxu0 0
    %212 = vmatpush1.bf16.msra.mxu0 0
    %213 = vmatprep.subr.bf16.mxu0 0
    %214 = vmatpush1.bf16.msra.mxu0 0
    %215 = vmatprep.subr.bf16.mxu0 0
    %216 = vmatpush1.bf16.msra.mxu0 0
    %217 = vmatprep.subr.bf16.mxu0 0
    %218 = vmatpush1.bf16.msra.mxu0 0
    %219 = vmatprep.subr.bf16.mxu0 0
    %220 = vmatpush1.bf16.msra.mxu0 0
    %221 = vmatprep.subr.bf16.mxu0 0
    %222 = vmatpush1.bf16.msra.mxu0 0
    %223 = vmatprep.subr.bf16.mxu0 0
    %224 = vmatpush1.bf16.msra.mxu0 0
    %225 = vmatprep.subr.bf16.mxu0 0
    %226 = vmatpush1.bf16.msra.mxu0 0
    %227 = vmatprep.mubr.bf16.mxu0 0
    %228 = vmatmul.mubr.bf16.gmra.mrb[0].mxu0 %v98
    %v229 = vpop.f32.mrb[0].mxu0
    %v230 = vadd.f32 0.0, %v229
    %v231 = vpop.f32.mrb[0].mxu0
    %v232 = vadd.f32 0.0, %v231
    %v233 = vpop.f32.mrb[0].mxu0
    %v234 = vadd.f32 0.0, %v233
    %v235 = vpop.f32.mrb[0].mxu0
    %v236 = vadd.f32 0.0, %v235
    %237 = vdwg.mxu0
    %v254 = vunpack.c.l.b16 %v82
    %v255 = vunpack.c.h.b16 %v82
    %v256 = vunpack.c.l.b16 %v83
    %v257 = vunpack.c.h.b16 %v83
    %v258 = vunpack.c.l.b16 %v84
    %v259 = vunpack.c.h.b16 %v84
    %v260 = vunpack.c.l.b16 %v85
    %v261 = vunpack.c.h.b16 %v85
    %v262 = vunpack.c.l.b16 %v86
    %v263 = vunpack.c.h.b16 %v86
    %v264 = vunpack.c.l.b16 %v87
    %v265 = vunpack.c.h.b16 %v87
    %v266 = vunpack.c.l.b16 %v88
    %v267 = vunpack.c.h.b16 %v88
    %v268 = vunpack.c.l.b16 %v89
    %v269 = vunpack.c.h.b16 %v89
    %v270 = vunpack.c.l.b16 %v90
    %v271 = vunpack.c.h.b16 %v90
    %v272 = vunpack.c.l.b16 %v91
    %v273 = vunpack.c.h.b16 %v91
    %v274 = vunpack.c.l.b16 %v92
    %v275 = vunpack.c.h.b16 %v92
    %v276 = vunpack.c.l.b16 %v93
    %v277 = vunpack.c.h.b16 %v93
    %v278 = vunpack.c.l.b16 %v94
    %v279 = vunpack.c.h.b16 %v94
    %v280 = vunpack.c.l.b16 %v95
    %v281 = vunpack.c.h.b16 %v95
    %v282 = vunpack.c.l.b16 %v96
    %v283 = vunpack.c.h.b16 %v96
    %v284 = vunpack.c.l.b16 %v97
    %v285 = vunpack.c.h.b16 %v97
    %v286 = vpack.c.b16 %v256, %v254
    %v287 = vpack.c.b16 %v257, %v255
    %v288 = vpack.c.b16 %v260, %v258
    %v289 = vpack.c.b16 %v261, %v259
    %v290 = vpack.c.b16 %v264, %v262
    %v291 = vpack.c.b16 %v265, %v263
    %v292 = vpack.c.b16 %v268, %v266
    %v293 = vpack.c.b16 %v269, %v267
    %v294 = vpack.c.b16 %v272, %v270
    %v295 = vpack.c.b16 %v273, %v271
    %v296 = vpack.c.b16 %v276, %v274
    %v297 = vpack.c.b16 %v277, %v275
    %v298 = vpack.c.b16 %v280, %v278
    %v299 = vpack.c.b16 %v281, %v279
    %v300 = vpack.c.b16 %v284, %v282
    %v301 = vpack.c.b16 %v285, %v283
    %318 = vmatprep.subr.bf16.mxu0 %v287
    %319 = vmatpush1.bf16.msra.mxu0 %v286
    %320 = vmatprep.subr.bf16.mxu0 %v289
    %321 = vmatpush1.bf16.msra.mxu0 %v288
    %322 = vmatprep.subr.bf16.mxu0 %v291
    %323 = vmatpush1.bf16.msra.mxu0 %v290
    %324 = vmatprep.subr.bf16.mxu0 %v293
    %325 = vmatpush1.bf16.msra.mxu0 %v292
    %326 = vmatprep.subr.bf16.mxu0 %v295
    %327 = vmatpush1.bf16.msra.mxu0 %v294
    %328 = vmatprep.subr.bf16.mxu0 %v297
    %329 = vmatpush1.bf16.msra.mxu0 %v296
    %330 = vmatprep.subr.bf16.mxu0 %v299
    %331 = vmatpush1.bf16.msra.mxu0 %v298
    %332 = vmatprep.subr.bf16.mxu0 %v301
    %333 = vmatpush1.bf16.msra.mxu0 %v300
    %334 = vmatprep.subr.bf16.mxu0 0
    %335 = vmatpush1.bf16.msra.mxu0 0
    %336 = vmatprep.subr.bf16.mxu0 0
    %337 = vmatpush1.bf16.msra.mxu0 0
    %338 = vmatprep.subr.bf16.mxu0 0
    %339 = vmatpush1.bf16.msra.mxu0 0
    %340 = vmatprep.subr.bf16.mxu0 0
    %341 = vmatpush1.bf16.msra.mxu0 0
    %342 = vmatprep.subr.bf16.mxu0 0
    %343 = vmatpush1.bf16.msra.mxu0 0
    %344 = vmatprep.subr.bf16.mxu0 0
    %345 = vmatpush1.bf16.msra.mxu0 0
    %346 = vmatprep.subr.bf16.mxu0 0
    %347 = vmatpush1.bf16.msra.mxu0 0
    %348 = vmatprep.subr.bf16.mxu0 0
    %349 = vmatpush1.bf16.msra.mxu0 0
    %350 = vmatprep.mubr.bf16.mxu0 0
    %351 = vmatmul.mubr.bf16.gmra.mrb[0].mxu0 %v81
    %v352 = vpop.f32.mrb[0].mxu0
    %v353 = vadd.f32 %v230, %v352
    %v354 = vpop.f32.mrb[0].mxu0
    %v355 = vadd.f32 %v232, %v354
    %v356 = vpop.f32.mrb[0].mxu0
    %v357 = vadd.f32 %v234, %v356
    %v358 = vpop.f32.mrb[0].mxu0
    %v359 = vadd.f32 %v236, %v358
    %360 = vdwg.mxu0
    %v361 = vld [vmem:[%s4] sm:$0x3]
    %v363 = vlaneseq
    %v364 = vshrl.u32 %v363, 7
    %v365 = vsub.s32 0, %v364
    %v366 = vrot.slane %v361, %v365
    %v367 = vlaneseq
    %v368 = vshrl.u32 %v367, 7
    %v369 = vsub.s32 1, %v368
    %v370 = vrot.slane %v361, %v369
    %v373 = vadd.f32 %v353, %v366
    %v374 = vadd.f32 %v355, %v370
    %v375 = vadd.f32 %v357, %v366
    %v376 = vadd.f32 %v359, %v370
    %v377 = vtanh.pop %v373
    %v378 = vtanh.pop %v375
    %v379 = vmul.f32 %v374, 0.5
    %v380 = vmul.f32 %v376, 0.5
    %v381 = vtanh.pop %v379
    %v382 = vtanh.pop %v380
    %v383 = vadd.f32 %v381, 1.0
    %v384 = vadd.f32 %v382, 1.0
    %v385 = vmul.f32 %v383, 0.5
    %v386 = vmul.f32 %v384, 0.5
    %v387 = vsub.f32 %v377, %v77
    %v388 = vsub.f32 %v378, %v78
    %v389 = vmul.f32 %v385, %v387
    %v390 = vmul.f32 %v386, %v388
    %v391 = vadd.f32 %v389, %v77
    %v392 = vadd.f32 %v390, %v78
    %393 = vst [vmem:[#allocation10] sm:$0xff] %v391
    %394 = vst [vmem:[#allocation10 + $0x8] sm:$0xff] %v392
    // Predicated region
    $region38: #{sfu_forward.1} parent=1 // pred_check
      _
    $region39: #{sfu_forward.1} parent=1 // pred_check_branch
      %396 = sbr.rel (0) target = $region41
    $region40: #{sfu_forward.1} parent=1 // pred_region
      %s398 = ssub.s32 256, 256
      %399 = vsyncadd [#allocation4], %s398
      %s400 = sshll.u32 [#allocation10], 4
      %s401 = int_to_ptr.vmem [resolvable:$true] %s400
      %406 = dma.vmem_to_hbm [thread:$0]  %s401, 256, %s5, [#allocation4], 128, 128, 8
    $region41: #{sfu_forward.1} parent=1 // pred_fallthru
      _
    // Predicated region
    $region42: #{sfu_forward.1} parent=1 // pred_check
      _
    $region43: #{sfu_forward.1} parent=1 // pred_check_branch
      %408 = sbr.rel (0) target = $region45
    $region44: #{sfu_forward.1} parent=1 // pred_region
      %409 = dma.done [#allocation4], 256
    $region45: #{sfu_forward.1} parent=1 // pred_fallthru
      _
    %410 = vsyncpa [#allocation3], 1
    %411 = vsyncpa [#allocation6], 1
    %412 = vsyncpa [#allocation9], 1
    %413 = vsyncpa [#allocation4], 1

</llo_original>
